<compile_context>
chip_gen: v6e
topology: v6e:2x2x1
jax: 0.10.0
libtpu: 0.0.40
codegen_flags: <defaults>
</compile_context>

<pallas_src>
import jax
import jax.numpy as jnp
from jax.experimental import pallas as pl
from jax.experimental.pallas import tpu as pltpu


def _hbm_copy_kernel(x_hbm, o_hbm, sem):
    # Direct HBM->HBM DMA of the whole array: no VMEM staging, no TensorCore work.
    copy = pltpu.make_async_copy(x_hbm, o_hbm, sem)
    copy.start()
    copy.wait()


def _alias_noop_kernel(x_hbm, o_hbm, flag_ref):
    # Output buffer aliases the input buffer (input_output_aliases={0: 0}),
    # so no data movement is required.  The SMEM flag write just keeps the
    # kernel body non-empty.
    del x_hbm, o_hbm
    flag_ref[0] = jnp.int32(1)


def gmm_forward(x, mode="dma"):
    """Identity forward of the GMM module.

    mode="dma"         -> real Pallas kernel: one HBM->HBM DMA copy.
    mode="alias"       -> Pallas kernel whose output aliases the input (zero bytes moved).
    mode="passthrough" -> return x directly (optimal; XLA elides the op).
    """
    if mode == "passthrough":
        return x

    out_shape = jax.ShapeDtypeStruct(x.shape, x.dtype)
    hbm_spec = pl.BlockSpec(memory_space=pl.ANY)

    if mode == "alias":
        return pl.pallas_call(
            _alias_noop_kernel,
            out_shape=out_shape,
            in_specs=[hbm_spec],
            out_specs=hbm_spec,
            scratch_shapes=[pltpu.SMEM((1,), jnp.int32)],
            input_output_aliases={0: 0},
        )(x)

    # mode == "dma": purely bandwidth bound, 2 * nbytes of HBM traffic, 0 flops.
    total_bytes = x.size * jnp.dtype(x.dtype).itemsize
    return pl.pallas_call(
        _hbm_copy_kernel,
        out_shape=out_shape,
        in_specs=[hbm_spec],
        out_specs=hbm_spec,
        scratch_shapes=[pltpu.SemaphoreType.DMA],
        cost_estimate=pl.CostEstimate(
            flops=0, transcendentals=0, bytes_accessed=2 * total_bytes),
    )(x)


if __name__ == "__main__":
    key = jax.random.PRNGKey(0)
    k1, k2 = jax.random.split(key)

    # Shape a GMM would see: [n_samples, n_features].
    X = jax.random.normal(k1, (64, 32), jnp.float32)

    # Default path: real Pallas kernel (single HBM->HBM DMA).
    out = jax.block_until_ready(gmm_forward(X))
    assert out.shape == X.shape and out.dtype == X.dtype
    assert bool(jnp.array_equal(out, X))

    # Zero-copy aliased path (output buffer == input buffer).
    out_alias = jax.block_until_ready(gmm_forward(X, mode="alias"))
    assert bool(jnp.array_equal(out_alias, X))

    # Arbitrary (non tile-aligned) shapes need no special casing with HBM->HBM DMA.
    X_odd = jax.random.normal(k2, (5, 7), jnp.float32)
    out_odd = jax.block_until_ready(gmm_forward(X_odd))
    assert bool(jnp.array_equal(out_odd, X_odd))

    # Optimal variant: no op at all.
    out_pt = jax.block_until_ready(gmm_forward(X, mode="passthrough"))
    assert bool(jnp.array_equal(out_pt, X))

    print("KERNEL_OK")
</pallas_src>

<mosaic_0001>
module attributes {stable_mosaic.version = 11 : i64} {
  func.func @_hbm_copy_kernel(%arg0: memref<64x32xf32, #tpu.memory_space<any>>, %arg1: memref<64x32xf32, #tpu.memory_space<any>>, %arg2: memref<!tpu.dma_semaphore, #tpu.memory_space<semaphore_mem>>) attributes {dimension_semantics = [], scalar_prefetch = 0 : i64, scratch_operands = 1 : i64, tpu.core_type = #tpu.core_type<tc>} {
    tpu.enqueue_dma source(%arg0 : memref<64x32xf32, #tpu.memory_space<any>>) target(%arg1 : memref<64x32xf32, #tpu.memory_space<any>>) target_semaphore(%arg2 : memref<!tpu.dma_semaphore, #tpu.memory_space<semaphore_mem>>)
    tpu.wait_dma2 semaphore(%arg2 : memref<!tpu.dma_semaphore, #tpu.memory_space<semaphore_mem>>) src(%arg0 : memref<64x32xf32, #tpu.memory_space<any>>) dst(%arg1 : memref<64x32xf32, #tpu.memory_space<any>>)
    return
  }
}

</mosaic_0001>

<llo_original>
// kernel: tpu_custom_call.1
$region0: #{tpu_custom_call.1}
  #allocation0 [shape = 'u32[]', space=smem, size = 0x4, offset = 0x4, fixed_abs, tag = 'smem constant byte address 0x4 - core index']
  #allocation1 [shape = 'u32[144,128]{1,0:T(1,128)}', space=vmem, size = 0x12000, scoped, tag = 'internal scratch']
  #allocation2 [shape = 's32[1]{0}', space=sflag, size = 0x4, scoped, tag = 'scratch operand']
  #allocation3 [shape = 's32[]', space=sflag, size = 0x4, offset = 0, fixed_abs, tag = 'sflag constant byte address 0x0 - dummy sync flag']
  %s0 = inlined_call_operand.vmem [shape: f32[64,32], index: 0, kind: input, shape index: {}]
  %s1 = inlined_call_operand.vmem [shape: f32[64,32], index: 1, kind: output, shape index: {}]
  %s2 = sld [smem:[#allocation0]]
  $region36: #{tpu_custom_call.1} parent=0
    _
  %s4 = ssub.s32 1, %s2
  %s5 = scalar_select 0, %s4, %s2
  %p7 = scmp.lt.u32.totalorder 64, 8
  %p8 = pneg %p7
  // Predicated region
  $region2: #{tpu_custom_call.1} parent=0 // pred_check
    _
  $region3: #{tpu_custom_call.1} parent=0 // pred_check_branch
    %10 = sbr.rel (%p7) target = $region5
  $region4: #{tpu_custom_call.1} parent=0 // pred_region
    %s26 = sand.u32 64, 7
    %p27 = scmp.eq.s32.totalorder %s26, 0
    // Predicated region
    $region17: #{tpu_custom_call.1} parent=4 // pred_check
      %p28 = pneg %p27
    $region18: #{tpu_custom_call.1} parent=4 // pred_check_branch
      %30 = sbr.rel (%p28) target = $region20
    $region19: #{tpu_custom_call.1} parent=4 // pred_region
      loop: start=0, step=1, limit=1
      $region21: #{tpu_custom_call.1} parent=19 // loop_pre_header
        _
      $region22: #{tpu_custom_call.1} parent=19 // loop_header
        %s32 = sphi 0, %s36
        %p33 = scmp.ge.s32.totalorder %s32, 1
        %s37 = sphi %s0, %s0
        %s38 = sphi %s1, %s1
      $region23: #{tpu_custom_call.1} parent=19 // loop_header_branch
        %35 = sbr.rel (%p33) target = $region27
      $region24: #{tpu_custom_call.1} parent=19 // loop_body
        %v39 = vld [vmem:[%s37] sm:$0xff]
        %40 = vst [vmem:[%s38] sm:$0xff] %v39
        %v41 = vld [vmem:[%s37 + $0x8] sm:$0xff]
        %42 = vst [vmem:[%s38 + $0x8] sm:$0xff] %v41
        %v43 = vld [vmem:[%s37 + $0x10] sm:$0xff]
        %44 = vst [vmem:[%s38 + $0x10] sm:$0xff] %v43
        %v45 = vld [vmem:[%s37 + $0x18] sm:$0xff]
        %46 = vst [vmem:[%s38 + $0x18] sm:$0xff] %v45
        %v47 = vld [vmem:[%s37 + $0x20] sm:$0xff]
        %48 = vst [vmem:[%s38 + $0x20] sm:$0xff] %v47
        %v49 = vld [vmem:[%s37 + $0x28] sm:$0xff]
        %50 = vst [vmem:[%s38 + $0x28] sm:$0xff] %v49
        %v51 = vld [vmem:[%s37 + $0x30] sm:$0xff]
        %52 = vst [vmem:[%s38 + $0x30] sm:$0xff] %v51
        %v53 = vld [vmem:[%s37 + $0x38] sm:$0xff]
        %54 = vst [vmem:[%s38 + $0x38] sm:$0xff] %v53
      $region25: #{tpu_custom_call.1} parent=19 // loop_footer
        %s36 = sadd.s32 1, %s32
      $region26: #{tpu_custom_call.1} parent=19 // loop_footer_branch
        %31 = sbr.rel target = $region22
      $region27: #{tpu_custom_call.1} parent=19 // loop_exit
        _
    $region20: #{tpu_custom_call.1} parent=4 // pred_fallthru
      _
    %p55 = pneg %p27
    // Predicated region
    $region28: #{tpu_custom_call.1} parent=4 // pred_check
      _
    $region29: #{tpu_custom_call.1} parent=4 // pred_check_branch
      %57 = sbr.rel (%p27) target = $region31
    $region30: #{tpu_custom_call.1} parent=4 // pred_region
      %s58 = sand.u32 64, 7
    $region31: #{tpu_custom_call.1} parent=4 // pred_fallthru
      _
  $region5: #{tpu_custom_call.1} parent=0 // pred_fallthru
    _
  // Predicated region
  $region6: #{tpu_custom_call.1} parent=0 // pred_check
    %p11 = pneg %p7
  $region7: #{tpu_custom_call.1} parent=0 // pred_check_branch
    %13 = sbr.rel (%p11) target = $region9
  $region8: #{tpu_custom_call.1} parent=0 // pred_region
    %s14 = sshll.u32 1, 64
    %s15 = ssub.s32 %s14, 1
    loop: start=0, step=1, limit=1
    $region10: #{tpu_custom_call.1} parent=8 // loop_pre_header
      _
    $region11: #{tpu_custom_call.1} parent=8 // loop_header
      %s17 = sphi 0, %s21
      %p18 = scmp.ge.s32.totalorder %s17, 1
      %s22 = sphi %s0, %s0
      %s23 = sphi %s1, %s1
    $region12: #{tpu_custom_call.1} parent=8 // loop_header_branch
      %20 = sbr.rel (%p18) target = $region16
    $region13: #{tpu_custom_call.1} parent=8 // loop_body
      %v24 = vld [vmem:[%s22] sm:%s15]
      %25 = vst [vmem:[%s23] sm:%s15] %v24
    $region14: #{tpu_custom_call.1} parent=8 // loop_footer
      %s21 = sadd.s32 1, %s17
    $region15: #{tpu_custom_call.1} parent=8 // loop_footer_branch
      %16 = sbr.rel target = $region11
    $region16: #{tpu_custom_call.1} parent=8 // loop_exit
      _
  $region9: #{tpu_custom_call.1} parent=0 // pred_fallthru
    _
  // Predicated region
  $region32: #{tpu_custom_call.1} parent=0 // pred_check
    _
  $region33: #{tpu_custom_call.1} parent=0 // pred_check_branch
    %61 = sbr.rel (0) target = $region35
  $region34: #{tpu_custom_call.1} parent=0 // pred_region
    %62 = vsyncadd [#allocation2], 1024
  $region35: #{tpu_custom_call.1} parent=0 // pred_fallthru
    _
  %s63 = smul.u32 64, 1
  %s64 = sshll.u32 %s63, 4
  %65 = dma.done [#allocation2], %s64
  %66 = vsyncmov [#allocation2]
  %s67 = vpop.sfrf %66
  %p68 = scmp.eq.s32.totalorder %s67, 0
  %p69 = pneg %p68
  %71 = shalt.err (%p69)

</llo_original>
